<compile_context>
chip_gen: v7x
topology: tpu7x:2x2x1
jax: 0.10.0
libtpu: 0.0.40
codegen_flags: <defaults>
</compile_context>

<pallas_src>
import jax
import jax.numpy as jnp
from jax.experimental import pallas as pl
from jax.experimental.pallas import tpu as pltpu


def _lstmnn_kernel(ids_ref, emb_ref, h0_ref, c0_ref, w_ref, b_ref,
                   wdec_ref, bdec_ref,
                   y_ref, hout_ref, cout_ref):
    """One LSTM timestep over all layers + linear decoder, fully VMEM-resident.

    Ref shapes:
      ids_ref  : (batch, 1) int32          VMEM  char ids (sublane-padded batch)
      emb_ref  : (nchars, H) bf16          VMEM  embedding table
      h0_ref   : (n_layer, batch, H) f32   VMEM
      c0_ref   : (n_layer, batch, H) f32   VMEM
      w_ref    : (n_layer, 2H, 4H) bf16    VMEM  [W_ih.T ; W_hh.T], gate order (i,f,o,g)
      b_ref    : (n_layer, 1, 4H) f32      VMEM  b_ih + b_hh, gate order (i,f,o,g)
      wdec_ref : (H, NPAD) bf16            VMEM  decoder weight.T, lane-padded to 128
      bdec_ref : (1, NPAD) f32             VMEM
      y_ref    : (batch, NPAD) f32         out  (lane-dense store)
      hout_ref : (n_layer, batch, H) f32   out  (aliased with h0)
      cout_ref : (n_layer, batch, H) f32   out  (aliased with c0)
    """
    n_layer, batch, H = h0_ref.shape
    nchars = emb_ref.shape[0]

    # One-hot embedding gather on the MXU: rides the otherwise-idle MXU slot and
    # produces one contiguous (batch, H) result (no masked-store chain, no scalar
    # load serialization).
    ids = ids_ref[...]                                              # (batch, 1) int32
    cols = jax.lax.broadcasted_iota(jnp.int32, (batch, nchars), 1)  # (batch, nchars)
    one_hot = (cols == ids).astype(jnp.float32)
    x = jnp.dot(one_hot, emb_ref[...].astype(jnp.float32),
                preferred_element_type=jnp.float32)                 # (batch, H)

    for l in range(n_layer):                    # static unroll; n_layer is small
        h_prev = h0_ref[l]                      # (batch, H) in vregs
        c_prev = c0_ref[l]
        xh = jnp.concatenate([x, h_prev], axis=1)   # (batch, 2H), stays in registers

        # Single fused gate matmul: (batch, 2H) @ (2H, 4H) + bias, f32 accumulate.
        gates = (jnp.dot(xh, w_ref[l].astype(jnp.float32),
                         preferred_element_type=jnp.float32) + b_ref[l])

        # Gate order (i, f, o, g): one sigmoid slab, one tanh slab (2 EUP pushes).
        sig = jax.nn.sigmoid(gates[:, 0:3 * H])
        i_g = sig[:, 0:H]
        f_g = sig[:, H:2 * H]
        o_g = sig[:, 2 * H:3 * H]
        g_g = jnp.tanh(gates[:, 3 * H:4 * H])

        c_new = f_g * c_prev + i_g * g_g
        h_new = o_g * jnp.tanh(c_new)
        hout_ref[l] = h_new
        cout_ref[l] = c_new
        x = h_new                               # input to the next layer (vregs)

    # Decoder on the last layer's hidden state: (batch, H) @ (H, NPAD), lane-dense store.
    y_ref[...] = (jnp.dot(x, wdec_ref[...].astype(jnp.float32),
                          preferred_element_type=jnp.float32) + bdec_ref[...])


def _vmem_spec():
    return pl.BlockSpec(memory_space=pltpu.MemorySpace.VMEM)


@jax.jit
def lstmnn_forward(inp, hidden, params):
    """Mirrors LSTMNN.forward(inp, hidden) -> (y, (h, c)). Single timestep."""
    emb = params["emb"]                         # (nchars, H) bf16
    h0, c0 = hidden                             # each (n_layer, batch, H) f32
    n_layer, batch, H = h0.shape
    assert n_layer >= 1, "LSTMNN requires at least one LSTM layer"
    nchars = emb.shape[0]
    npad = params["wdec_t_pad"].shape[1]

    # Sublane-pad batch to a multiple of 8 (full-sublane VPU ops, unmasked stores).
    bpad = max(8, ((batch + 7) // 8) * 8)
    ids = jnp.zeros((bpad, 1), jnp.int32).at[:batch, 0].set(inp.astype(jnp.int32))
    h0p = jnp.zeros((n_layer, bpad, H), jnp.float32).at[:, :batch, :].set(h0)
    c0p = jnp.zeros((n_layer, bpad, H), jnp.float32).at[:, :batch, :].set(c0)

    out_shapes = (
        jax.ShapeDtypeStruct((bpad, npad), jnp.float32),         # y (lane/sublane padded)
        jax.ShapeDtypeStruct((n_layer, bpad, H), jnp.float32),   # h_out
        jax.ShapeDtypeStruct((n_layer, bpad, H), jnp.float32),   # c_out
    )

    y_pad, h_out, c_out = pl.pallas_call(
        _lstmnn_kernel,
        out_shape=out_shapes,
        in_specs=[_vmem_spec() for _ in range(8)],
        out_specs=(_vmem_spec(), _vmem_spec(), _vmem_spec()),
        # h0p/c0p are jit-internal temporaries (created by the padding above), so
        # this alias takes effect without defensive copies.
        input_output_aliases={2: 1, 3: 2},
    )(ids, emb, h0p, c0p,
      params["w_cat"], params["b"], params["wdec_t_pad"], params["bdec_pad"])

    return y_pad[:batch, :nchars], (h_out[:, :batch, :], c_out[:, :batch, :])


def _gate_perm(H):
    """PyTorch LSTM gate order (i, f, g, o) -> kernel order (i, f, o, g)."""
    ar = jnp.arange
    return jnp.concatenate([ar(0, H), ar(H, 2 * H), ar(3 * H, 4 * H), ar(2 * H, 3 * H)])


def init_params(key, nchars, hid_s, n_layer, lane_pad=128):
    """Deterministic synthetic parameters matching nn.Embedding / nn.LSTM / nn.Linear shapes."""
    ks = jax.random.split(key, 7)
    H = hid_s
    scale = 1.0 / jnp.sqrt(jnp.float32(H))
    emb = jax.random.normal(ks[0], (nchars, H), jnp.float32)
    # PyTorch LSTM weights: weight_ih_l{l} (4H, in), weight_hh_l{l} (4H, H).
    w_ih = jax.random.uniform(ks[1], (n_layer, 4 * H, H), jnp.float32, -scale, scale)
    w_hh = jax.random.uniform(ks[2], (n_layer, 4 * H, H), jnp.float32, -scale, scale)
    b_ih = jax.random.uniform(ks[3], (n_layer, 4 * H), jnp.float32, -scale, scale)
    b_hh = jax.random.uniform(ks[4], (n_layer, 4 * H), jnp.float32, -scale, scale)
    # Decoder: nn.Linear(H, nchars) -> weight (nchars, H), bias (nchars,)
    w_dec = jax.random.uniform(ks[5], (nchars, H), jnp.float32, -scale, scale)
    b_dec = jax.random.uniform(ks[6], (nchars,), jnp.float32, -scale, scale)

    # Quantize weight matrices to bf16 for kernel storage (halves HBM->VMEM weight DMA).
    # The bf16-rounded values (upcast back to f32) are the model's parameters, used by
    # both the kernel and the pure-JAX reference, so numerics agree tightly.
    emb_bf = emb.astype(jnp.bfloat16)
    w_ih = w_ih.astype(jnp.bfloat16).astype(jnp.float32)
    w_hh = w_hh.astype(jnp.bfloat16).astype(jnp.float32)
    w_dec = w_dec.astype(jnp.bfloat16).astype(jnp.float32)

    # Host-side packing for the kernel.
    perm = _gate_perm(H)
    w_ih_r = w_ih[:, perm, :]                   # gates reordered to (i, f, o, g)
    w_hh_r = w_hh[:, perm, :]
    b_r = (b_ih + b_hh)[:, perm]                # fused bias, reordered
    # Stacked [W_ih.T ; W_hh.T] -> (n_layer, 2H, 4H) for the single fused dot.
    w_cat = jnp.concatenate([jnp.transpose(w_ih_r, (0, 2, 1)),
                             jnp.transpose(w_hh_r, (0, 2, 1))], axis=1)
    # Lane-dense decoder: pad nchars up to a multiple of 128.
    npad = max(lane_pad, ((nchars + lane_pad - 1) // lane_pad) * lane_pad)
    wdec_t_pad = jnp.zeros((H, npad), jnp.float32).at[:, :nchars].set(w_dec.T)
    bdec_pad = jnp.zeros((1, npad), jnp.float32).at[:, :nchars].set(b_dec)

    return {
        "emb": emb_bf,                               # (nchars, H) bf16
        "w_cat": w_cat.astype(jnp.bfloat16),         # (n_layer, 2H, 4H) bf16
        "b": b_r[:, None, :],                        # (n_layer, 1, 4H) f32
        "wdec_t_pad": wdec_t_pad.astype(jnp.bfloat16),   # (H, npad) bf16
        "bdec_pad": bdec_pad,                        # (1, npad) f32
        # bf16-rounded f32 copies (PyTorch layout / gate order) for the pure-JAX reference
        "_emb": emb_bf.astype(jnp.float32),
        "_w_ih": w_ih, "_w_hh": w_hh, "_b_ih": b_ih, "_b_hh": b_hh,
        "_w_dec": w_dec, "_b_dec": b_dec,
    }


def reference_forward(inp, hidden, params):
    """Pure-JAX reference matching PyTorch LSTM semantics (seq_len=1)."""
    h0, c0 = hidden
    n_layer, _, H = h0.shape
    x = jnp.take(params["_emb"], inp, axis=0)
    h_out, c_out = [], []
    for l in range(n_layer):
        gates = (x @ params["_w_ih"][l].T + params["_b_ih"][l]
                 + h0[l] @ params["_w_hh"][l].T + params["_b_hh"][l])
        i_g = jax.nn.sigmoid(gates[:, 0 * H:1 * H])
        f_g = jax.nn.sigmoid(gates[:, 1 * H:2 * H])
        g_g = jnp.tanh(gates[:, 2 * H:3 * H])
        o_g = jax.nn.sigmoid(gates[:, 3 * H:4 * H])
        c_new = f_g * c0[l] + i_g * g_g
        h_new = o_g * jnp.tanh(c_new)
        h_out.append(h_new)
        c_out.append(c_new)
        x = h_new
    y = x @ params["_w_dec"].T + params["_b_dec"]
    return y, (jnp.stack(h_out), jnp.stack(c_out))


if __name__ == "__main__":
    nchars, hid_s, n_layer, batch = 64, 32, 2, 2

    key = jax.random.PRNGKey(0)
    pkey, ikey = jax.random.split(key)
    params = init_params(pkey, nchars, hid_s, n_layer)

    inp = jax.random.randint(ikey, (batch,), 0, nchars, dtype=jnp.int32)
    # init_hidden(batch)
    h0 = jnp.zeros((n_layer, batch, hid_s), jnp.float32)
    c0 = jnp.zeros((n_layer, batch, hid_s), jnp.float32)
    hidden = (h0, c0)

    y, (h_new, c_new) = lstmnn_forward(inp, hidden, params)
    jax.block_until_ready((y, h_new, c_new))

    y_ref, (h_ref, c_ref) = reference_forward(inp, hidden, params)
    assert y.shape == (batch, nchars)
    assert h_new.shape == (n_layer, batch, hid_s)
    assert c_new.shape == (n_layer, batch, hid_s)
    assert jnp.allclose(y, y_ref, atol=1e-4, rtol=1e-4)
    assert jnp.allclose(h_new, h_ref, atol=1e-4, rtol=1e-4)
    assert jnp.allclose(c_new, c_ref, atol=1e-4, rtol=1e-4)

    print("KERNEL_OK")
</pallas_src>

<mosaic_0001>
module attributes {stable_mosaic.version = 11 : i64} {
  func.func @_lstmnn_kernel(%arg0: memref<8x1xi32, #tpu.memory_space<vmem>>, %arg1: memref<64x32xbf16, #tpu.memory_space<vmem>>, %arg2: memref<2x8x32xf32, #tpu.memory_space<vmem>>, %arg3: memref<2x8x32xf32, #tpu.memory_space<vmem>>, %arg4: memref<2x64x128xbf16, #tpu.memory_space<vmem>>, %arg5: memref<2x1x128xf32, #tpu.memory_space<vmem>>, %arg6: memref<32x128xbf16, #tpu.memory_space<vmem>>, %arg7: memref<1x128xf32, #tpu.memory_space<vmem>>, %arg8: memref<8x128xf32, #tpu.memory_space<vmem>>, %arg9: memref<2x8x32xf32, #tpu.memory_space<vmem>>, %arg10: memref<2x8x32xf32, #tpu.memory_space<vmem>>) attributes {dimension_semantics = [], scalar_prefetch = 0 : i64, scratch_operands = 0 : i64, tpu.core_type = #tpu.core_type<tc>} {
    %c0 = arith.constant 0 : index
    %c0_0 = arith.constant 0 : index
    %0 = vector.load %arg0[%c0, %c0_0] : memref<8x1xi32, #tpu.memory_space<vmem>>, vector<8x1xi32>
    %1 = tpu.iota {dimensions = array<i32: 1>} : vector<8x64xi32>
    %2 = vector.broadcast %0 : vector<8x1xi32> to vector<8x64xi32>
    %3 = arith.cmpi eq, %1, %2 : vector<8x64xi32>
    %4 = arith.extui %3 : vector<8x64xi1> to vector<8x64xi32>
    %5 = arith.sitofp %4 : vector<8x64xi32> to vector<8x64xf32>
    %c0_1 = arith.constant 0 : index
    %c0_2 = arith.constant 0 : index
    %6 = vector.load %arg1[%c0_1, %c0_2] : memref<64x32xbf16, #tpu.memory_space<vmem>>, vector<64x32xbf16>
    %7 = arith.extf %6 : vector<64x32xbf16> to vector<64x32xf32>
    %cst = arith.constant dense<0.000000e+00> : vector<8x32xf32>
    %8 = tpu.matmul %5, %7, %cst {dimension_numbers = #tpu.dot_dimension_numbers<[1], [0], [0], [1], [0, 0, 1, 1], [], []>} : vector<8x64xf32>, vector<64x32xf32>, vector<8x32xf32> -> vector<8x32xf32>
    %c0_3 = arith.constant 0 : index
    %c0_4 = arith.constant 0 : index
    %c0_5 = arith.constant 0 : index
    %9 = vector.load %arg2[%c0_3, %c0_4, %c0_5] : memref<2x8x32xf32, #tpu.memory_space<vmem>>, vector<1x8x32xf32>
    %10 = vector.shape_cast %9 : vector<1x8x32xf32> to vector<8x32xf32>
    %c0_6 = arith.constant 0 : index
    %c0_7 = arith.constant 0 : index
    %c0_8 = arith.constant 0 : index
    %11 = vector.load %arg3[%c0_6, %c0_7, %c0_8] : memref<2x8x32xf32, #tpu.memory_space<vmem>>, vector<1x8x32xf32>
    %12 = vector.shape_cast %11 : vector<1x8x32xf32> to vector<8x32xf32>
    %13 = tpu.concatenate %8, %10 in 1 : vector<8x32xf32>, vector<8x32xf32> -> vector<8x64xf32>
    %c0_9 = arith.constant 0 : index
    %c0_10 = arith.constant 0 : index
    %c0_11 = arith.constant 0 : index
    %14 = vector.load %arg4[%c0_9, %c0_10, %c0_11] : memref<2x64x128xbf16, #tpu.memory_space<vmem>>, vector<1x64x128xbf16>
    %15 = vector.shape_cast %14 : vector<1x64x128xbf16> to vector<64x128xbf16>
    %16 = arith.extf %15 : vector<64x128xbf16> to vector<64x128xf32>
    %cst_12 = arith.constant dense<0.000000e+00> : vector<8x128xf32>
    %17 = tpu.matmul %13, %16, %cst_12 {dimension_numbers = #tpu.dot_dimension_numbers<[1], [0], [0], [1], [0, 0, 1, 1], [], []>} : vector<8x64xf32>, vector<64x128xf32>, vector<8x128xf32> -> vector<8x128xf32>
    %c0_13 = arith.constant 0 : index
    %c0_14 = arith.constant 0 : index
    %c0_15 = arith.constant 0 : index
    %18 = vector.load %arg5[%c0_13, %c0_14, %c0_15] : memref<2x1x128xf32, #tpu.memory_space<vmem>>, vector<1x1x128xf32>
    %19 = vector.shape_cast %18 : vector<1x1x128xf32> to vector<1x128xf32>
    %20 = vector.broadcast %19 : vector<1x128xf32> to vector<8x128xf32>
    %21 = arith.addf %17, %20 : vector<8x128xf32>
    %22 = vector.extract_strided_slice %21 {offsets = [0, 0], sizes = [8, 96], strides = [1, 1]} : vector<8x128xf32> to vector<8x96xf32>
    %23 = arith.negf %22 : vector<8x96xf32>
    %24 = math.exp %23 : vector<8x96xf32>
    %cst_16 = arith.constant 1.000000e+00 : f32
    %25 = vector.broadcast %cst_16 : f32 to vector<8x96xf32>
    %26 = arith.addf %25, %24 : vector<8x96xf32>
    %27 = arith.divf %25, %26 : vector<8x96xf32>
    %28 = vector.extract_strided_slice %27 {offsets = [0, 0], sizes = [8, 32], strides = [1, 1]} : vector<8x96xf32> to vector<8x32xf32>
    %29 = vector.extract_strided_slice %27 {offsets = [0, 32], sizes = [8, 32], strides = [1, 1]} : vector<8x96xf32> to vector<8x32xf32>
    %30 = vector.extract_strided_slice %27 {offsets = [0, 64], sizes = [8, 32], strides = [1, 1]} : vector<8x96xf32> to vector<8x32xf32>
    %31 = vector.extract_strided_slice %21 {offsets = [0, 96], sizes = [8, 32], strides = [1, 1]} : vector<8x128xf32> to vector<8x32xf32>
    %32 = math.tanh %31 : vector<8x32xf32>
    %33 = arith.mulf %29, %12 : vector<8x32xf32>
    %34 = arith.mulf %28, %32 : vector<8x32xf32>
    %35 = arith.addf %33, %34 : vector<8x32xf32>
    %36 = math.tanh %35 : vector<8x32xf32>
    %37 = arith.mulf %30, %36 : vector<8x32xf32>
    %c0_17 = arith.constant 0 : index
    %c0_18 = arith.constant 0 : index
    %c0_19 = arith.constant 0 : index
    %38 = vector.load %arg9[%c0_17, %c0_18, %c0_19] : memref<2x8x32xf32, #tpu.memory_space<vmem>>, vector<1x8x32xf32>
    %39 = vector.shape_cast %38 : vector<1x8x32xf32> to vector<8x32xf32>
    %40 = vector.shape_cast %37 : vector<8x32xf32> to vector<1x8x32xf32>
    tpu.vector_store %arg9[%c0_17, %c0_18, %c0_19], %40 {strides = array<i32>} : memref<2x8x32xf32, #tpu.memory_space<vmem>>, vector<1x8x32xf32>,
    %c0_20 = arith.constant 0 : index
    %c0_21 = arith.constant 0 : index
    %c0_22 = arith.constant 0 : index
    %41 = vector.load %arg10[%c0_20, %c0_21, %c0_22] : memref<2x8x32xf32, #tpu.memory_space<vmem>>, vector<1x8x32xf32>
    %42 = vector.shape_cast %41 : vector<1x8x32xf32> to vector<8x32xf32>
    %43 = vector.shape_cast %35 : vector<8x32xf32> to vector<1x8x32xf32>
    tpu.vector_store %arg10[%c0_20, %c0_21, %c0_22], %43 {strides = array<i32>} : memref<2x8x32xf32, #tpu.memory_space<vmem>>, vector<1x8x32xf32>,
    %c1 = arith.constant 1 : index
    %c0_23 = arith.constant 0 : index
    %c0_24 = arith.constant 0 : index
    %44 = vector.load %arg2[%c1, %c0_23, %c0_24] : memref<2x8x32xf32, #tpu.memory_space<vmem>>, vector<1x8x32xf32>
    %45 = vector.shape_cast %44 : vector<1x8x32xf32> to vector<8x32xf32>
    %c1_25 = arith.constant 1 : index
    %c0_26 = arith.constant 0 : index
    %c0_27 = arith.constant 0 : index
    %46 = vector.load %arg3[%c1_25, %c0_26, %c0_27] : memref<2x8x32xf32, #tpu.memory_space<vmem>>, vector<1x8x32xf32>
    %47 = vector.shape_cast %46 : vector<1x8x32xf32> to vector<8x32xf32>
    %48 = tpu.concatenate %37, %45 in 1 : vector<8x32xf32>, vector<8x32xf32> -> vector<8x64xf32>
    %c1_28 = arith.constant 1 : index
    %c0_29 = arith.constant 0 : index
    %c0_30 = arith.constant 0 : index
    %49 = vector.load %arg4[%c1_28, %c0_29, %c0_30] : memref<2x64x128xbf16, #tpu.memory_space<vmem>>, vector<1x64x128xbf16>
    %50 = vector.shape_cast %49 : vector<1x64x128xbf16> to vector<64x128xbf16>
    %51 = arith.extf %50 : vector<64x128xbf16> to vector<64x128xf32>
    %cst_31 = arith.constant dense<0.000000e+00> : vector<8x128xf32>
    %52 = tpu.matmul %48, %51, %cst_31 {dimension_numbers = #tpu.dot_dimension_numbers<[1], [0], [0], [1], [0, 0, 1, 1], [], []>} : vector<8x64xf32>, vector<64x128xf32>, vector<8x128xf32> -> vector<8x128xf32>
    %c1_32 = arith.constant 1 : index
    %c0_33 = arith.constant 0 : index
    %c0_34 = arith.constant 0 : index
    %53 = vector.load %arg5[%c1_32, %c0_33, %c0_34] : memref<2x1x128xf32, #tpu.memory_space<vmem>>, vector<1x1x128xf32>
    %54 = vector.shape_cast %53 : vector<1x1x128xf32> to vector<1x128xf32>
    %55 = vector.broadcast %54 : vector<1x128xf32> to vector<8x128xf32>
    %56 = arith.addf %52, %55 : vector<8x128xf32>
    %57 = vector.extract_strided_slice %56 {offsets = [0, 0], sizes = [8, 96], strides = [1, 1]} : vector<8x128xf32> to vector<8x96xf32>
    %58 = arith.negf %57 : vector<8x96xf32>
    %59 = math.exp %58 : vector<8x96xf32>
    %cst_35 = arith.constant 1.000000e+00 : f32
    %60 = vector.broadcast %cst_35 : f32 to vector<8x96xf32>
    %61 = arith.addf %60, %59 : vector<8x96xf32>
    %62 = arith.divf %60, %61 : vector<8x96xf32>
    %63 = vector.extract_strided_slice %62 {offsets = [0, 0], sizes = [8, 32], strides = [1, 1]} : vector<8x96xf32> to vector<8x32xf32>
    %64 = vector.extract_strided_slice %62 {offsets = [0, 32], sizes = [8, 32], strides = [1, 1]} : vector<8x96xf32> to vector<8x32xf32>
    %65 = vector.extract_strided_slice %62 {offsets = [0, 64], sizes = [8, 32], strides = [1, 1]} : vector<8x96xf32> to vector<8x32xf32>
    %66 = vector.extract_strided_slice %56 {offsets = [0, 96], sizes = [8, 32], strides = [1, 1]} : vector<8x128xf32> to vector<8x32xf32>
    %67 = math.tanh %66 : vector<8x32xf32>
    %68 = arith.mulf %64, %47 : vector<8x32xf32>
    %69 = arith.mulf %63, %67 : vector<8x32xf32>
    %70 = arith.addf %68, %69 : vector<8x32xf32>
    %71 = math.tanh %70 : vector<8x32xf32>
    %72 = arith.mulf %65, %71 : vector<8x32xf32>
    %c1_36 = arith.constant 1 : index
    %c0_37 = arith.constant 0 : index
    %c0_38 = arith.constant 0 : index
    %73 = vector.load %arg9[%c1_36, %c0_37, %c0_38] : memref<2x8x32xf32, #tpu.memory_space<vmem>>, vector<1x8x32xf32>
    %74 = vector.shape_cast %73 : vector<1x8x32xf32> to vector<8x32xf32>
    %75 = vector.shape_cast %72 : vector<8x32xf32> to vector<1x8x32xf32>
    tpu.vector_store %arg9[%c1_36, %c0_37, %c0_38], %75 {strides = array<i32>} : memref<2x8x32xf32, #tpu.memory_space<vmem>>, vector<1x8x32xf32>,
    %c1_39 = arith.constant 1 : index
    %c0_40 = arith.constant 0 : index
    %c0_41 = arith.constant 0 : index
    %76 = vector.load %arg10[%c1_39, %c0_40, %c0_41] : memref<2x8x32xf32, #tpu.memory_space<vmem>>, vector<1x8x32xf32>
    %77 = vector.shape_cast %76 : vector<1x8x32xf32> to vector<8x32xf32>
    %78 = vector.shape_cast %70 : vector<8x32xf32> to vector<1x8x32xf32>
    tpu.vector_store %arg10[%c1_39, %c0_40, %c0_41], %78 {strides = array<i32>} : memref<2x8x32xf32, #tpu.memory_space<vmem>>, vector<1x8x32xf32>,
    %c0_42 = arith.constant 0 : index
    %c0_43 = arith.constant 0 : index
    %79 = vector.load %arg6[%c0_42, %c0_43] : memref<32x128xbf16, #tpu.memory_space<vmem>>, vector<32x128xbf16>
    %80 = arith.extf %79 : vector<32x128xbf16> to vector<32x128xf32>
    %cst_44 = arith.constant dense<0.000000e+00> : vector<8x128xf32>
    %81 = tpu.matmul %72, %80, %cst_44 {dimension_numbers = #tpu.dot_dimension_numbers<[1], [0], [0], [1], [0, 0, 1, 1], [], []>} : vector<8x32xf32>, vector<32x128xf32>, vector<8x128xf32> -> vector<8x128xf32>
    %c0_45 = arith.constant 0 : index
    %c0_46 = arith.constant 0 : index
    %82 = vector.load %arg7[%c0_45, %c0_46] : memref<1x128xf32, #tpu.memory_space<vmem>>, vector<1x128xf32>
    %83 = vector.broadcast %82 : vector<1x128xf32> to vector<8x128xf32>
    %84 = arith.addf %81, %83 : vector<8x128xf32>
    %c0_47 = arith.constant 0 : index
    %c0_48 = arith.constant 0 : index
    %85 = vector.load %arg8[%c0_47, %c0_48] : memref<8x128xf32, #tpu.memory_space<vmem>>, vector<8x128xf32>
    tpu.vector_store %arg8[%c0_47, %c0_48], %84 {strides = array<i32>} : memref<8x128xf32, #tpu.memory_space<vmem>>, vector<8x128xf32>,
    return
  }
}

</mosaic_0001>

<llo_original>
// kernel: lstmnn_forward.1
$region0: #{lstmnn_forward.1}
  #allocation0 [shape = 'u32[]', space=smem, size = 0x4, offset = 0x4, fixed_abs, tag = 'smem constant byte address 0x4 - core index']
  #allocation1 [shape = 'u32[144,128]{1,0:T(1,128)}', space=vmem, size = 0x12000, scoped, tag = 'internal scratch']
  %s0 = inlined_call_operand.vmem [shape: s32[8,1], index: 0, kind: input, shape index: {}]
  %s1 = inlined_call_operand.vmem [shape: bf16[64,32], index: 1, kind: input, shape index: {}]
  %s2 = inlined_call_operand.vmem [shape: f32[2,8,32], index: 2, kind: input, shape index: {}, may-alias: {2,9}]
  %s3 = inlined_call_operand.vmem [shape: f32[2,8,32], index: 3, kind: input, shape index: {}, may-alias: {3,10}]
  %s4 = inlined_call_operand.vmem [shape: bf16[2,64,128], index: 4, kind: input, shape index: {}]
  %s5 = inlined_call_operand.vmem [shape: f32[2,1,128], index: 5, kind: input, shape index: {}]
  %s6 = inlined_call_operand.vmem [shape: bf16[32,128], index: 6, kind: input, shape index: {}]
  %s7 = inlined_call_operand.vmem [shape: f32[1,128], index: 7, kind: input, shape index: {}]
  %s8 = inlined_call_operand.vmem [shape: f32[8,128], index: 8, kind: output, shape index: {0}]
  %s9 = inlined_call_operand.vmem [shape: f32[2,8,32], index: 9, kind: output, shape index: {1}, may-alias: {2,9}]
  %s10 = inlined_call_operand.vmem [shape: f32[2,8,32], index: 10, kind: output, shape index: {2}, may-alias: {3,10}]
  %11 = xla_tuple %s8, %s9, %s10
  %s12 = sld [smem:[#allocation0]]
  $region58: #{lstmnn_forward.1} parent=0
    _
  %s14 = ssub.s32 1, %s12
  %s15 = scalar_select 0, %s14, %s12
  // Predicated region
  $region2: #{lstmnn_forward.1} parent=0 // pred_check
    _
  $region3: #{lstmnn_forward.1} parent=0 // pred_check_branch
    %17 = sbr.rel (0) target = $region5
  $region4: #{lstmnn_forward.1} parent=0 // pred_region
    _
  $region5: #{lstmnn_forward.1} parent=0 // pred_fallthru
    _
  // Predicated region
  $region6: #{lstmnn_forward.1} parent=0 // pred_check
    _
  $region7: #{lstmnn_forward.1} parent=0 // pred_check_branch
    %19 = sbr.rel (0) target = $region9
  $region8: #{lstmnn_forward.1} parent=0 // pred_region
    _
  $region9: #{lstmnn_forward.1} parent=0 // pred_fallthru
    _
  // Predicated region
  $region10: #{lstmnn_forward.1} parent=0 // pred_check
    _
  $region11: #{lstmnn_forward.1} parent=0 // pred_check_branch
    %21 = sbr.rel (0) target = $region13
  $region12: #{lstmnn_forward.1} parent=0 // pred_region
    _
  $region13: #{lstmnn_forward.1} parent=0 // pred_fallthru
    _
  // Predicated region
  $region14: #{lstmnn_forward.1} parent=0 // pred_check
    _
  $region15: #{lstmnn_forward.1} parent=0 // pred_check_branch
    %23 = sbr.rel (0) target = $region17
  $region16: #{lstmnn_forward.1} parent=0 // pred_region
    _
  $region17: #{lstmnn_forward.1} parent=0 // pred_fallthru
    _
  // Predicated region
  $region18: #{lstmnn_forward.1} parent=0 // pred_check
    _
  $region19: #{lstmnn_forward.1} parent=0 // pred_check_branch
    %25 = sbr.rel (0) target = $region21
  $region20: #{lstmnn_forward.1} parent=0 // pred_region
    _
  $region21: #{lstmnn_forward.1} parent=0 // pred_fallthru
    _
  // Predicated region
  $region22: #{lstmnn_forward.1} parent=0 // pred_check
    _
  $region23: #{lstmnn_forward.1} parent=0 // pred_check_branch
    %27 = sbr.rel (0) target = $region25
  $region24: #{lstmnn_forward.1} parent=0 // pred_region
    _
  $region25: #{lstmnn_forward.1} parent=0 // pred_fallthru
    _
  // Predicated region
  $region26: #{lstmnn_forward.1} parent=0 // pred_check
    _
  $region27: #{lstmnn_forward.1} parent=0 // pred_check_branch
    %29 = sbr.rel (0) target = $region29
  $region28: #{lstmnn_forward.1} parent=0 // pred_region
    _
  $region29: #{lstmnn_forward.1} parent=0 // pred_fallthru
    _
  // Predicated region
  $region30: #{lstmnn_forward.1} parent=0 // pred_check
    _
  $region31: #{lstmnn_forward.1} parent=0 // pred_check_branch
    %31 = sbr.rel (0) target = $region33
  $region32: #{lstmnn_forward.1} parent=0 // pred_region
    _
  $region33: #{lstmnn_forward.1} parent=0 // pred_fallthru
    _
  %v32 = vld [vmem:[%s0] sm:$0xff]
  %v33 = vlaneseq
  %v34 = vand.u32 %v33, 127
  %35 = vset.pattern.permute.xlu0 0
  %36 = vperm.xlu0 %35, %v32
  %v37 = vpop.permute.xlu0 %36
  %vm38 = vcmp.eq.s32.totalorder %v34, %v37
  %v39 = vsel %vm38, 1, 0
  %v40 = vcvt.s32.f32 %v39
  %v41 = vld [vmem:[%s1] sm:$0xf]
  %v42 = vld [vmem:[%s1 + $0x4] sm:$0xf]
  %v43 = vld [vmem:[%s1 + $0x8] sm:$0xf]
  %v44 = vld [vmem:[%s1 + $0xc] sm:$0xf]
  %v45 = vld [vmem:[%s1 + $0x10] sm:$0xf]
  %v46 = vld [vmem:[%s1 + $0x14] sm:$0xf]
  %v47 = vld [vmem:[%s1 + $0x18] sm:$0xf]
  %v48 = vld [vmem:[%s1 + $0x1c] sm:$0xf]
  %v49 = vunpack.c.l.bf16 %v41
  %v50 = vunpack.c.l.bf16 %v42
  %v51 = vunpack.c.l.bf16 %v43
  %v52 = vunpack.c.l.bf16 %v44
  %v53 = vunpack.c.l.bf16 %v45
  %v54 = vunpack.c.l.bf16 %v46
  %v55 = vunpack.c.l.bf16 %v47
  %v56 = vunpack.c.l.bf16 %v48
  %vm57 = vcmask 523264
  %v59 = vsel %vm57, %v40, 0
  %61 = vmatprep.subr.mxu0 0.0
  %62 = vmatpush1.msra.mxu0 %v49
  %63 = vmatprep.subr.mxu0 0.0
  %64 = vmatpush1.msra.mxu0 %v50
  %65 = vmatprep.subr.mxu0 0.0
  %66 = vmatpush1.msra.mxu0 %v51
  %67 = vmatprep.subr.mxu0 0.0
  %68 = vmatpush1.msra.mxu0 %v52
  %69 = vmatprep.subr.mxu0 0.0
  %70 = vmatpush1.msra.mxu0 %v53
  %71 = vmatprep.subr.mxu0 0.0
  %72 = vmatpush1.msra.mxu0 %v54
  %73 = vmatprep.subr.mxu0 0.0
  %74 = vmatpush1.msra.mxu0 %v55
  %75 = vmatprep.subr.mxu0 0.0
  %76 = vmatpush1.msra.mxu0 %v56
  %77 = vmatprep.subr.mxu0 0.0
  %78 = vmatpush1.msra.mxu0 0.0
  %79 = vmatprep.subr.mxu0 0.0
  %80 = vmatpush1.msra.mxu0 0.0
  %81 = vmatprep.subr.mxu0 0.0
  %82 = vmatpush1.msra.mxu0 0.0
  %83 = vmatprep.subr.mxu0 0.0
  %84 = vmatpush1.msra.mxu0 0.0
  %85 = vmatprep.subr.mxu0 0.0
  %86 = vmatpush1.msra.mxu0 0.0
  %87 = vmatprep.subr.mxu0 0.0
  %88 = vmatpush1.msra.mxu0 0.0
  %89 = vmatprep.subr.mxu0 0.0
  %90 = vmatpush1.msra.mxu0 0.0
  %91 = vmatprep.subr.mxu0 0.0
  %92 = vmatpush1.msra.mxu0 0.0
  %93 = vmatprep.subr.mxu0 0.0
  %94 = vmatpush1.msra.mxu0 0.0
  %95 = vmatprep.subr.mxu0 0.0
  %96 = vmatpush1.msra.mxu0 0.0
  %97 = vmatprep.subr.mxu0 0.0
  %98 = vmatpush1.msra.mxu0 0.0
  %99 = vmatprep.subr.mxu0 0.0
  %100 = vmatpush1.msra.mxu0 0.0
  %101 = vmatprep.subr.mxu0 0.0
  %102 = vmatpush1.msra.mxu0 0.0
  %103 = vmatprep.subr.mxu0 0.0
  %104 = vmatpush1.msra.mxu0 0.0
  %105 = vmatprep.subr.mxu0 0.0
  %106 = vmatpush1.msra.mxu0 0.0
  %107 = vmatprep.subr.mxu0 0.0
  %108 = vmatpush1.msra.mxu0 0.0
  %109 = vmatprep.subr.mxu0 0.0
  %110 = vmatpush1.msra.mxu0 0.0
  %111 = vmatprep.subr.mxu0 0.0
  %112 = vmatpush1.msra.mxu0 0.0
  %113 = vmatprep.subr.mxu0 0.0
  %114 = vmatpush1.msra.mxu0 0.0
  %115 = vmatprep.subr.mxu0 0.0
  %116 = vmatpush1.msra.mxu0 0.0
  %117 = vmatprep.subr.mxu0 0.0
  %118 = vmatpush1.msra.mxu0 0.0
  %119 = vmatprep.subr.mxu0 0.0
  %120 = vmatpush1.msra.mxu0 0.0
  %121 = vmatprep.subr.mxu0 0.0
  %122 = vmatpush1.msra.mxu0 0.0
  %123 = vmatprep.subr.mxu0 0.0
  %124 = vmatpush1.msra.mxu0 0.0
  %125 = vmatprep.mubr.f32.mxu0 0.0
  %126 = vmatmul.mubr.f32.gmra.mrb[0].mxu0 %v59
  %v127 = vpop.f32.mrb[0].mxu0
  %v128 = vadd.f32 0.0, %v127
  %v129 = vpop.f32.mrb[0].mxu0
  %130 = vdwg.mxu0
  %v131 = vld [vmem:[%s2] sm:$0xff]
  %v132 = vld [vmem:[%s3] sm:$0xff]
  %134 = vrot.lane.b32.xlu0 %v131, 32
  %v135 = vpop.permute.xlu0 %134
  %vm137 = vcmask 261120
  %v138 = vsel %vm137, %v128, %v135
  %v139 = vld [vmem:[%s4] sm:$0xf]
  %v140 = vld [vmem:[%s4 + $0x4] sm:$0xf]
  %v141 = vld [vmem:[%s4 + $0x8] sm:$0xf]
  %v142 = vld [vmem:[%s4 + $0xc] sm:$0xf]
  %v143 = vld [vmem:[%s4 + $0x10] sm:$0xf]
  %v144 = vld [vmem:[%s4 + $0x14] sm:$0xf]
  %v145 = vld [vmem:[%s4 + $0x18] sm:$0xf]
  %v146 = vld [vmem:[%s4 + $0x1c] sm:$0xf]
  %v147 = vunpack.c.l.bf16 %v139
  %v148 = vunpack.c.l.bf16 %v140
  %v149 = vunpack.c.l.bf16 %v141
  %v150 = vunpack.c.l.bf16 %v142
  %v151 = vunpack.c.l.bf16 %v143
  %v152 = vunpack.c.l.bf16 %v144
  %v153 = vunpack.c.l.bf16 %v145
  %v154 = vunpack.c.l.bf16 %v146
  %v155 = vld [vmem:[%s5] sm:$0x1]
  %v157 = vlaneseq
  %v158 = vshrl.u32 %v157, 7
  %v159 = vsub.s32 0, %v158
  %v160 = vrot.slane %v155, %v159
  %v163 = vsel %vm57, %v138, 0
  %165 = vmatprep.subr.mxu0 0.0
  %166 = vmatpush1.msra.mxu0 %v147
  %167 = vmatprep.subr.mxu0 0.0
  %168 = vmatpush1.msra.mxu0 %v148
  %169 = vmatprep.subr.mxu0 0.0
  %170 = vmatpush1.msra.mxu0 %v149
  %171 = vmatprep.subr.mxu0 0.0
  %172 = vmatpush1.msra.mxu0 %v150
  %173 = vmatprep.subr.mxu0 0.0
  %174 = vmatpush1.msra.mxu0 %v151
  %175 = vmatprep.subr.mxu0 0.0
  %176 = vmatpush1.msra.mxu0 %v152
  %177 = vmatprep.subr.mxu0 0.0
  %178 = vmatpush1.msra.mxu0 %v153
  %179 = vmatprep.subr.mxu0 0.0
  %180 = vmatpush1.msra.mxu0 %v154
  %181 = vmatprep.subr.mxu0 0.0
  %182 = vmatpush1.msra.mxu0 0.0
  %183 = vmatprep.subr.mxu0 0.0
  %184 = vmatpush1.msra.mxu0 0.0
  %185 = vmatprep.subr.mxu0 0.0
  %186 = vmatpush1.msra.mxu0 0.0
  %187 = vmatprep.subr.mxu0 0.0
  %188 = vmatpush1.msra.mxu0 0.0
  %189 = vmatprep.subr.mxu0 0.0
  %190 = vmatpush1.msra.mxu0 0.0
  %191 = vmatprep.subr.mxu0 0.0
  %192 = vmatpush1.msra.mxu0 0.0
  %193 = vmatprep.subr.mxu0 0.0
  %194 = vmatpush1.msra.mxu0 0.0
  %195 = vmatprep.subr.mxu0 0.0
  %196 = vmatpush1.msra.mxu0 0.0
  %197 = vmatprep.subr.mxu0 0.0
  %198 = vmatpush1.msra.mxu0 0.0
  %199 = vmatprep.subr.mxu0 0.0
  %200 = vmatpush1.msra.mxu0 0.0
  %201 = vmatprep.subr.mxu0 0.0
  %202 = vmatpush1.msra.mxu0 0.0
  %203 = vmatprep.subr.mxu0 0.0
  %204 = vmatpush1.msra.mxu0 0.0
  %205 = vmatprep.subr.mxu0 0.0
  %206 = vmatpush1.msra.mxu0 0.0
  %207 = vmatprep.subr.mxu0 0.0
  %208 = vmatpush1.msra.mxu0 0.0
  %209 = vmatprep.subr.mxu0 0.0
  %210 = vmatpush1.msra.mxu0 0.0
  %211 = vmatprep.subr.mxu0 0.0
  %212 = vmatpush1.msra.mxu0 0.0
  %213 = vmatprep.subr.mxu0 0.0
  %214 = vmatpush1.msra.mxu0 0.0
  %215 = vmatprep.subr.mxu0 0.0
  %216 = vmatpush1.msra.mxu0 0.0
  %217 = vmatprep.subr.mxu0 0.0
  %218 = vmatpush1.msra.mxu0 0.0
  %219 = vmatprep.subr.mxu0 0.0
  %220 = vmatpush1.msra.mxu0 0.0
  %221 = vmatprep.subr.mxu0 0.0
  %222 = vmatpush1.msra.mxu0 0.0
  %223 = vmatprep.subr.mxu0 0.0
  %224 = vmatpush1.msra.mxu0 0.0
  %225 = vmatprep.subr.mxu0 0.0
  %226 = vmatpush1.msra.mxu0 0.0
  %227 = vmatprep.subr.mxu0 0.0
  %228 = vmatpush1.msra.mxu0 0.0
  %229 = vmatprep.mubr.f32.mxu0 0.0
  %230 = vmatmul.mubr.f32.gmra.mrb[0].mxu0 %v163
  %v231 = vpop.f32.mrb[0].mxu0
  %v232 = vadd.f32 %v160, %v231
  %v233 = vpop.f32.mrb[0].mxu0
  %234 = vdwg.mxu0
  %v235 = vxor.u32 %v232, 2147483648
  %v236 = vmul.f32 %v235, 1.442695
  %v237 = vpow.pop %v236
  %v238 = vadd.f32 %v237, 1.0
  %v239 = vrcp.pop %v238
  %v240 = vmul.f32 1.0, %v239
  %v241 = vtanh.pop %v232
  %243 = vrot.lane.b32.xlu0 %v132, 32
  %v244 = vpop.permute.xlu0 %243
  %v246 = vmul.f32 %v240, %v244
  %248 = vrot.lane.b32.xlu0 %v241, 32
  %v249 = vpop.permute.xlu0 %248
  %v251 = vmul.f32 %v240, %v249
  %253 = vrot.lane.b32.xlu0 %v251, 32
  %v254 = vpop.permute.xlu0 %253
  %v256 = vadd.f32 %v246, %v254
  %v257 = vtanh.pop %v256
  %259 = vrot.lane.b32.xlu0 %v257, 32
  %v260 = vpop.permute.xlu0 %259
  %v262 = vmul.f32 %v240, %v260
  %264 = vrot.lane.b32.xlu0 %v262, 64
  %v265 = vpop.permute.xlu0 %264
  %267 = vst.msk [vmem:[%s9] sm:$0xff] %vm137, %v265
  %269 = vrot.lane.b32.xlu0 %v256, 96
  %v270 = vpop.permute.xlu0 %269
  %272 = vst.msk [vmem:[%s10] sm:$0xff] %vm137, %v270
  %s273 = scalar_lea.vmem %s2, 8
  %v274 = vld [vmem:[%s273] sm:$0xff]
  %s275 = scalar_lea.vmem %s3, 8
  %v276 = vld [vmem:[%s275] sm:$0xff]
  %278 = vrot.lane.b32.xlu0 %v274, 32
  %v279 = vpop.permute.xlu0 %278
  %v281 = vsel %vm137, %v265, %v279
  %s282 = scalar_lea.vmem %s4, 32
  %v283 = vld [vmem:[%s282] sm:$0xf]
  %v284 = vld [vmem:[%s282 + $0x4] sm:$0xf]
  %v285 = vld [vmem:[%s282 + $0x8] sm:$0xf]
  %v286 = vld [vmem:[%s282 + $0xc] sm:$0xf]
  %v287 = vld [vmem:[%s282 + $0x10] sm:$0xf]
  %v288 = vld [vmem:[%s282 + $0x14] sm:$0xf]
  %v289 = vld [vmem:[%s282 + $0x18] sm:$0xf]
  %v290 = vld [vmem:[%s282 + $0x1c] sm:$0xf]
  %v291 = vunpack.c.l.bf16 %v283
  %v292 = vunpack.c.l.bf16 %v284
  %v293 = vunpack.c.l.bf16 %v285
  %v294 = vunpack.c.l.bf16 %v286
  %v295 = vunpack.c.l.bf16 %v287
  %v296 = vunpack.c.l.bf16 %v288
  %v297 = vunpack.c.l.bf16 %v289
  %v298 = vunpack.c.l.bf16 %v290
  %s299 = scalar_lea.vmem %s5, 1
  %v300 = vld [vmem:[%s299] sm:$0x1]
  %v302 = vlaneseq
  %v303 = vshrl.u32 %v302, 7
  %v304 = vsub.s32 0, %v303
  %v305 = vrot.slane %v300, %v304
  %v308 = vsel %vm57, %v281, 0
  %310 = vmatprep.subr.mxu0 0.0
  %311 = vmatpush1.msra.mxu0 %v291
  %312 = vmatprep.subr.mxu0 0.0
  %313 = vmatpush1.msra.mxu0 %v292
  %314 = vmatprep.subr.mxu0 0.0
  %315 = vmatpush1.msra.mxu0 %v293
  %316 = vmatprep.subr.mxu0 0.0
  %317 = vmatpush1.msra.mxu0 %v294
  %318 = vmatprep.subr.mxu0 0.0
  %319 = vmatpush1.msra.mxu0 %v295
  %320 = vmatprep.subr.mxu0 0.0
  %321 = vmatpush1.msra.mxu0 %v296
  %322 = vmatprep.subr.mxu0 0.0
  %323 = vmatpush1.msra.mxu0 %v297
  %324 = vmatprep.subr.mxu0 0.0
  %325 = vmatpush1.msra.mxu0 %v298
  %326 = vmatprep.subr.mxu0 0.0
  %327 = vmatpush1.msra.mxu0 0.0
  %328 = vmatprep.subr.mxu0 0.0
  %329 = vmatpush1.msra.mxu0 0.0
  %330 = vmatprep.subr.mxu0 0.0
  %331 = vmatpush1.msra.mxu0 0.0
  %332 = vmatprep.subr.mxu0 0.0
  %333 = vmatpush1.msra.mxu0 0.0
  %334 = vmatprep.subr.mxu0 0.0
  %335 = vmatpush1.msra.mxu0 0.0
  %336 = vmatprep.subr.mxu0 0.0
  %337 = vmatpush1.msra.mxu0 0.0
  %338 = vmatprep.subr.mxu0 0.0
  %339 = vmatpush1.msra.mxu0 0.0
  %340 = vmatprep.subr.mxu0 0.0
  %341 = vmatpush1.msra.mxu0 0.0
  %342 = vmatprep.subr.mxu0 0.0
  %343 = vmatpush1.msra.mxu0 0.0
  %344 = vmatprep.subr.mxu0 0.0
  %345 = vmatpush1.msra.mxu0 0.0
  %346 = vmatprep.subr.mxu0 0.0
  %347 = vmatpush1.msra.mxu0 0.0
  %348 = vmatprep.subr.mxu0 0.0
  %349 = vmatpush1.msra.mxu0 0.0
  %350 = vmatprep.subr.mxu0 0.0
  %351 = vmatpush1.msra.mxu0 0.0
  %352 = vmatprep.subr.mxu0 0.0
  %353 = vmatpush1.msra.mxu0 0.0
  %354 = vmatprep.subr.mxu0 0.0
  %355 = vmatpush1.msra.mxu0 0.0
  %356 = vmatprep.subr.mxu0 0.0
  %357 = vmatpush1.msra.mxu0 0.0
  %358 = vmatprep.subr.mxu0 0.0
  %359 = vmatpush1.msra.mxu0 0.0
  %360 = vmatprep.subr.mxu0 0.0
  %361 = vmatpush1.msra.mxu0 0.0
  %362 = vmatprep.subr.mxu0 0.0
  %363 = vmatpush1.msra.mxu0 0.0
  %364 = vmatprep.subr.mxu0 0.0
  %365 = vmatpush1.msra.mxu0 0.0
  %366 = vmatprep.subr.mxu0 0.0
  %367 = vmatpush1.msra.mxu0 0.0
  %368 = vmatprep.subr.mxu0 0.0
  %369 = vmatpush1.msra.mxu0 0.0
  %370 = vmatprep.subr.mxu0 0.0
  %371 = vmatpush1.msra.mxu0 0.0
  %372 = vmatprep.subr.mxu0 0.0
  %373 = vmatpush1.msra.mxu0 0.0
  %374 = vmatprep.mubr.f32.mxu0 0.0
  %375 = vmatmul.mubr.f32.gmra.mrb[0].mxu0 %v308
  %v376 = vpop.f32.mrb[0].mxu0
  %v377 = vadd.f32 %v305, %v376
  %v378 = vpop.f32.mrb[0].mxu0
  %379 = vdwg.mxu0
  %v380 = vxor.u32 %v377, 2147483648
  %v381 = vmul.f32 %v380, 1.442695
  %v382 = vpow.pop %v381
  %v383 = vadd.f32 %v382, 1.0
  %v384 = vrcp.pop %v383
  %v385 = vmul.f32 1.0, %v384
  %v386 = vtanh.pop %v377
  %388 = vrot.lane.b32.xlu0 %v276, 32
  %v389 = vpop.permute.xlu0 %388
  %v391 = vmul.f32 %v385, %v389
  %393 = vrot.lane.b32.xlu0 %v386, 32
  %v394 = vpop.permute.xlu0 %393
  %v396 = vmul.f32 %v385, %v394
  %398 = vrot.lane.b32.xlu0 %v396, 32
  %v399 = vpop.permute.xlu0 %398
  %v401 = vadd.f32 %v391, %v399
  %v402 = vtanh.pop %v401
  %404 = vrot.lane.b32.xlu0 %v402, 32
  %v405 = vpop.permute.xlu0 %404
  %v407 = vmul.f32 %v385, %v405
  %409 = vrot.lane.b32.xlu0 %v407, 64
  %v410 = vpop.permute.xlu0 %409
  %s412 = scalar_lea.vmem %s9, 8
  %413 = vst.msk [vmem:[%s412] sm:$0xff] %vm137, %v410
  %415 = vrot.lane.b32.xlu0 %v401, 96
  %v416 = vpop.permute.xlu0 %415
  %s418 = scalar_lea.vmem %s10, 8
  %419 = vst.msk [vmem:[%s418] sm:$0xff] %vm137, %v416
  %v420 = vld [vmem:[%s6] sm:$0xf]
  %v421 = vld [vmem:[%s6 + $0x4] sm:$0xf]
  %v422 = vld [vmem:[%s6 + $0x8] sm:$0xf]
  %v423 = vld [vmem:[%s6 + $0xc] sm:$0xf]
  %v424 = vunpack.c.l.bf16 %v420
  %v425 = vunpack.c.l.bf16 %v421
  %v426 = vunpack.c.l.bf16 %v422
  %v427 = vunpack.c.l.bf16 %v423
  %v428 = vld [vmem:[%s7] sm:$0x1]
  %v430 = vlaneseq
  %v431 = vshrl.u32 %v430, 7
  %v432 = vsub.s32 0, %v431
  %v433 = vrot.slane %v428, %v432
  %v435 = vsel %vm137, %v410, 0
  %437 = vmatprep.subr.mxu0 0.0
  %438 = vmatpush1.msra.mxu0 %v424
  %439 = vmatprep.subr.mxu0 0.0
  %440 = vmatpush1.msra.mxu0 %v425
  %441 = vmatprep.subr.mxu0 0.0
  %442 = vmatpush1.msra.mxu0 %v426
  %443 = vmatprep.subr.mxu0 0.0
  %444 = vmatpush1.msra.mxu0 %v427
  %445 = vmatprep.subr.mxu0 0.0
  %446 = vmatpush1.msra.mxu0 0.0
  %447 = vmatprep.subr.mxu0 0.0
  %448 = vmatpush1.msra.mxu0 0.0
  %449 = vmatprep.subr.mxu0 0.0
  %450 = vmatpush1.msra.mxu0 0.0
  %451 = vmatprep.subr.mxu0 0.0
  %452 = vmatpush1.msra.mxu0 0.0
  %453 = vmatprep.subr.mxu0 0.0
  %454 = vmatpush1.msra.mxu0 0.0
  %455 = vmatprep.subr.mxu0 0.0
  %456 = vmatpush1.msra.mxu0 0.0
  %457 = vmatprep.subr.mxu0 0.0
  %458 = vmatpush1.msra.mxu0 0.0
  %459 = vmatprep.subr.mxu0 0.0
  %460 = vmatpush1.msra.mxu0 0.0
  %461 = vmatprep.subr.mxu0 0.0
  %462 = vmatpush1.msra.mxu0 0.0
  %463 = vmatprep.subr.mxu0 0.0
  %464 = vmatpush1.msra.mxu0 0.0
  %465 = vmatprep.subr.mxu0 0.0
  %466 = vmatpush1.msra.mxu0 0.0
  %467 = vmatprep.subr.mxu0 0.0
  %468 = vmatpush1.msra.mxu0 0.0
  %469 = vmatprep.subr.mxu0 0.0
  %470 = vmatpush1.msra.mxu0 0.0
  %471 = vmatprep.subr.mxu0 0.0
  %472 = vmatpush1.msra.mxu0 0.0
  %473 = vmatprep.subr.mxu0 0.0
  %474 = vmatpush1.msra.mxu0 0.0
  %475 = vmatprep.subr.mxu0 0.0
  %476 = vmatpush1.msra.mxu0 0.0
  %477 = vmatprep.subr.mxu0 0.0
  %478 = vmatpush1.msra.mxu0 0.0
  %479 = vmatprep.subr.mxu0 0.0
  %480 = vmatpush1.msra.mxu0 0.0
  %481 = vmatprep.subr.mxu0 0.0
  %482 = vmatpush1.msra.mxu0 0.0
  %483 = vmatprep.subr.mxu0 0.0
  %484 = vmatpush1.msra.mxu0 0.0
  %485 = vmatprep.subr.mxu0 0.0
  %486 = vmatpush1.msra.mxu0 0.0
  %487 = vmatprep.subr.mxu0 0.0
  %488 = vmatpush1.msra.mxu0 0.0
  %489 = vmatprep.subr.mxu0 0.0
  %490 = vmatpush1.msra.mxu0 0.0
  %491 = vmatprep.subr.mxu0 0.0
  %492 = vmatpush1.msra.mxu0 0.0
  %493 = vmatprep.subr.mxu0 0.0
  %494 = vmatpush1.msra.mxu0 0.0
  %495 = vmatprep.subr.mxu0 0.0
  %496 = vmatpush1.msra.mxu0 0.0
  %497 = vmatprep.subr.mxu0 0.0
  %498 = vmatpush1.msra.mxu0 0.0
  %499 = vmatprep.subr.mxu0 0.0
  %500 = vmatpush1.msra.mxu0 0.0
  %501 = vmatprep.mubr.f32.mxu0 0.0
  %502 = vmatmul.mubr.f32.gmra.mrb[0].mxu0 %v435
  %v503 = vpop.f32.mrb[0].mxu0
  %v504 = vadd.f32 %v433, %v503
  %v505 = vpop.f32.mrb[0].mxu0
  %506 = vdwg.mxu0
  %507 = vst [vmem:[%s8] sm:$0xff] %v504
  // Predicated region
  $region34: #{lstmnn_forward.1} parent=0 // pred_check
    _
  $region35: #{lstmnn_forward.1} parent=0 // pred_check_branch
    %509 = sbr.rel (0) target = $region37
  $region36: #{lstmnn_forward.1} parent=0 // pred_region
    _
  $region37: #{lstmnn_forward.1} parent=0 // pred_fallthru
    _
  // Predicated region
  $region38: #{lstmnn_forward.1} parent=0 // pred_check
    _
  $region39: #{lstmnn_forward.1} parent=0 // pred_check_branch
    %511 = sbr.rel (0) target = $region41
  $region40: #{lstmnn_forward.1} parent=0 // pred_region
    _
  $region41: #{lstmnn_forward.1} parent=0 // pred_fallthru
    _
  // Predicated region
  $region42: #{lstmnn_forward.1} parent=0 // pred_check
    _
  $region43: #{lstmnn_forward.1} parent=0 // pred_check_branch
    %513 = sbr.rel (0) target = $region45
  $region44: #{lstmnn_forward.1} parent=0 // pred_region
    _
  $region45: #{lstmnn_forward.1} parent=0 // pred_fallthru
    _
  // Predicated region
  $region46: #{lstmnn_forward.1} parent=0 // pred_check
    _
  $region47: #{lstmnn_forward.1} parent=0 // pred_check_branch
    %515 = sbr.rel (0) target = $region49
  $region48: #{lstmnn_forward.1} parent=0 // pred_region
    _
  $region49: #{lstmnn_forward.1} parent=0 // pred_fallthru
    _
  // Predicated region
  $region50: #{lstmnn_forward.1} parent=0 // pred_check
    _
  $region51: #{lstmnn_forward.1} parent=0 // pred_check_branch
    %517 = sbr.rel (0) target = $region53
  $region52: #{lstmnn_forward.1} parent=0 // pred_region
    _
  $region53: #{lstmnn_forward.1} parent=0 // pred_fallthru
    _
  // Predicated region
  $region54: #{lstmnn_forward.1} parent=0 // pred_check
    _
  $region55: #{lstmnn_forward.1} parent=0 // pred_check_branch
    %519 = sbr.rel (0) target = $region57
  $region56: #{lstmnn_forward.1} parent=0 // pred_region
    _
  $region57: #{lstmnn_forward.1} parent=0 // pred_fallthru
    _

</llo_original>
